<compile_context>
chip_gen: v5e
topology: v5e:2x2
jax: 0.10.0
libtpu: 0.0.40
codegen_flags: <defaults>
</compile_context>

<pallas_src>
import math
import functools

import jax
import jax.numpy as jnp
from jax import lax
from jax.experimental import pallas as pl
from jax.experimental.pallas import tpu as pltpu


def _self_attention_kernel(x_ref, wqkv_ref, bqkv_ref, o_ref, acc_ref, *,
                           num_heads, head_dim, hidden_size):
    """One grid step = one batch element: fused QKV proj + per-head attention."""
    H = hidden_size
    x = x_ref[0].astype(jnp.bfloat16)                      # (S, H) bf16 for MXU

    # --- fused Q/K/V projection: one MXU pass with N = 3H, one bias add ---
    qkv = jnp.dot(x, wqkv_ref[...], preferred_element_type=jnp.float32)
    qkv = qkv + bqkv_ref[...]                              # (S, 3H) f32
    # Q columns were pre-scaled by 1/sqrt(head_dim) on the host.

    # --- per-head scaled dot-product attention ---
    for h in range(num_heads):
        lo = h * head_dim
        hi = lo + head_dim
        qh = qkv[:, lo:hi].astype(jnp.bfloat16)            # (S, d)
        kh = qkv[:, H + lo:H + hi].astype(jnp.bfloat16)    # (S, d)
        vh = qkv[:, 2 * H + lo:2 * H + hi].astype(jnp.bfloat16)

        # scores = qh @ kh^T without materializing a transpose:
        # contract the last dim of both operands directly on the MXU.
        s = lax.dot_general(
            qh, kh,
            dimension_numbers=(((1,), (1,)), ((), ())),
            preferred_element_type=jnp.float32)            # (S, S) f32

        # numerically-stable softmax, kept in f32
        m = jnp.max(s, axis=-1, keepdims=True)
        p = jnp.exp(s - m)
        denom = jnp.sum(p, axis=-1, keepdims=True)
        p = p * pl.reciprocal(denom, approx=True)          # EUP, ~free slot

        # dropout(p=0.1) is identity in eval mode.
        ctx = jnp.dot(p.astype(jnp.bfloat16), vh,
                      preferred_element_type=jnp.float32)  # (S, d) f32

        acc_ref[:, lo:hi] = ctx                            # accumulate in VMEM scratch

    # single lane-dense (S, H) store to the output block
    o_ref[0] = acc_ref[...].astype(o_ref.dtype)


def self_attention(hidden_states, wq, bq, wk, bk, wv, bv, *, num_heads):
    """hidden_states: (B, S, H) f32. Weights: (H, H) in x@W layout, biases (H,)."""
    B, S, H = hidden_states.shape
    assert H % num_heads == 0
    head_dim = H // num_heads
    scale = 1.0 / math.sqrt(head_dim)

    # Parameter prep (in a real model this is done once at init):
    #   - fold 1/sqrt(d) into the Q projection weight/bias,
    #   - fuse Q/K/V into a single (H, 3H) weight and (1, 3H) bias,
    #   - keep the fused weight in bf16 for the MXU (accumulation is f32).
    wqkv = jnp.concatenate([wq * scale, wk, wv], axis=1).astype(jnp.bfloat16)
    bqkv = jnp.concatenate([bq * scale, bk, bv], axis=0).reshape(1, 3 * H)
    bqkv = bqkv.astype(jnp.float32)

    kernel = functools.partial(_self_attention_kernel, num_heads=num_heads,
                               head_dim=head_dim, hidden_size=H)

    return pl.pallas_call(
        kernel,
        out_shape=jax.ShapeDtypeStruct((B, S, H), hidden_states.dtype),
        grid_spec=pltpu.PrefetchScalarGridSpec(
            num_scalar_prefetch=0,
            grid=(B,),
            in_specs=[
                pl.BlockSpec((1, S, H), lambda b: (b, 0, 0)),      # x (per batch)
                # constant-index weight/bias blocks: fetched once, reused across grid
                pl.BlockSpec((H, 3 * H), lambda b: (0, 0)),        # fused Wqkv (bf16)
                pl.BlockSpec((1, 3 * H), lambda b: (0, 0)),        # fused bias (f32)
            ],
            out_specs=pl.BlockSpec((1, S, H), lambda b: (b, 0, 0)),
            scratch_shapes=[pltpu.VMEM((S, H), jnp.float32)],      # context accumulator
        ),
        compiler_params=pltpu.CompilerParams(
            dimension_semantics=("parallel",),
            vmem_limit_bytes=48 * 1024 * 1024,   # explicit budget; fits v7x's 64 MiB
        ),
    )(hidden_states, wqkv, bqkv)


def _reference(hidden_states, wq, bq, wk, bk, wv, bv, *, num_heads):
    """Pure-JAX f32 reference replicating the PyTorch forward (eval mode)."""
    B, S, H = hidden_states.shape
    d = H // num_heads
    q = hidden_states @ wq + bq
    k = hidden_states @ wk + bk
    v = hidden_states @ wv + bv

    def split(x):  # (B,S,H) -> (B,heads,S,d)
        return x.reshape(B, S, num_heads, d).transpose(0, 2, 1, 3)

    qh, kh, vh = split(q), split(k), split(v)
    scores = jnp.einsum("bhqd,bhkd->bhqk", qh, kh) / math.sqrt(d)
    probs = jax.nn.softmax(scores, axis=-1)
    ctx = jnp.einsum("bhqk,bhkd->bhqd", probs, vh)
    return ctx.transpose(0, 2, 1, 3).reshape(B, S, H)


if __name__ == "__main__":
    B, S, H = 2, 8, 32
    num_heads = 4

    key = jax.random.PRNGKey(0)
    kx, kwq, kbq, kwk, kbk, kwv, kbv = jax.random.split(key, 7)

    x = jax.random.normal(kx, (B, S, H), dtype=jnp.float32)
    bound = 1.0 / math.sqrt(H)  # mimic nn.Linear uniform init scale
    wq = jax.random.uniform(kwq, (H, H), jnp.float32, -bound, bound)
    bq = jax.random.uniform(kbq, (H,), jnp.float32, -bound, bound)
    wk = jax.random.uniform(kwk, (H, H), jnp.float32, -bound, bound)
    bk = jax.random.uniform(kbk, (H,), jnp.float32, -bound, bound)
    wv = jax.random.uniform(kwv, (H, H), jnp.float32, -bound, bound)
    bv = jax.random.uniform(kbv, (H,), jnp.float32, -bound, bound)

    out = self_attention(x, wq, bq, wk, bk, wv, bv, num_heads=num_heads)
    out = jax.block_until_ready(out)

    ref = _reference(x, wq, bq, wk, bk, wv, bv, num_heads=num_heads)
    assert out.shape == (B, S, H)
    # bf16 MXU inputs + approx reciprocal => relaxed tolerance vs. the f32 reference
    assert jnp.allclose(out, ref, atol=2e-2, rtol=2e-2), "mismatch vs reference"

    print("KERNEL_OK")
</pallas_src>

<mosaic_0001>
module attributes {stable_mosaic.version = 11 : i64} {
  func.func @_self_attention_kernel(%arg0: i32, %arg1: memref<1x8x32xf32, #tpu.memory_space<vmem>>, %arg2: memref<32x96xbf16, #tpu.memory_space<vmem>>, %arg3: memref<1x96xf32, #tpu.memory_space<vmem>>, %arg4: memref<1x8x32xf32, #tpu.memory_space<vmem>>, %arg5: memref<8x32xf32, #tpu.memory_space<vmem>>) attributes {dimension_semantics = [#tpu.dimension_semantics<parallel>], iteration_bounds = array<i64: 2>, scalar_prefetch = 0 : i64, scratch_operands = 1 : i64, tpu.core_type = #tpu.core_type<tc>, window_params = [{transform_indices = @transform_0, window_bounds = array<i64: 1, 8, 32>}, {pipeline_mode = #tpu.pipeline_mode<synchronous>, transform_indices = @transform_1, window_bounds = array<i64: 32, 96>}, {pipeline_mode = #tpu.pipeline_mode<synchronous>, transform_indices = @transform_2, window_bounds = array<i64: 1, 96>}, {transform_indices = @transform_3, window_bounds = array<i64: 1, 8, 32>}]} {
    %c0 = arith.constant 0 : index
    %c0_0 = arith.constant 0 : index
    %c0_1 = arith.constant 0 : index
    %0 = vector.load %arg1[%c0, %c0_0, %c0_1] : memref<1x8x32xf32, #tpu.memory_space<vmem>>, vector<1x8x32xf32>
    %1 = vector.shape_cast %0 : vector<1x8x32xf32> to vector<8x32xf32>
    %2 = arith.truncf %1 : vector<8x32xf32> to vector<8x32xbf16>
    %c0_2 = arith.constant 0 : index
    %c0_3 = arith.constant 0 : index
    %3 = vector.load %arg2[%c0_2, %c0_3] : memref<32x96xbf16, #tpu.memory_space<vmem>>, vector<32x96xbf16>
    %cst = arith.constant dense<0.000000e+00> : vector<8x96xf32>
    %4 = tpu.matmul %2, %3, %cst {dimension_numbers = #tpu.dot_dimension_numbers<[1], [0], [0], [1], [0, 0, 1, 1], [], []>} : vector<8x32xbf16>, vector<32x96xbf16>, vector<8x96xf32> -> vector<8x96xf32>
    %c0_4 = arith.constant 0 : index
    %c0_5 = arith.constant 0 : index
    %5 = vector.load %arg3[%c0_4, %c0_5] : memref<1x96xf32, #tpu.memory_space<vmem>>, vector<1x96xf32>
    %6 = vector.broadcast %5 : vector<1x96xf32> to vector<8x96xf32>
    %7 = arith.addf %4, %6 : vector<8x96xf32>
    %8 = vector.extract_strided_slice %7 {offsets = [0, 0], sizes = [8, 8], strides = [1, 1]} : vector<8x96xf32> to vector<8x8xf32>
    %9 = arith.truncf %8 : vector<8x8xf32> to vector<8x8xbf16>
    %10 = vector.extract_strided_slice %7 {offsets = [0, 32], sizes = [8, 8], strides = [1, 1]} : vector<8x96xf32> to vector<8x8xf32>
    %11 = arith.truncf %10 : vector<8x8xf32> to vector<8x8xbf16>
    %12 = vector.extract_strided_slice %7 {offsets = [0, 64], sizes = [8, 8], strides = [1, 1]} : vector<8x96xf32> to vector<8x8xf32>
    %13 = arith.truncf %12 : vector<8x8xf32> to vector<8x8xbf16>
    %cst_6 = arith.constant dense<0.000000e+00> : vector<8x8xf32>
    %14 = tpu.matmul %9, %11, %cst_6 {dimension_numbers = #tpu.dot_dimension_numbers<[1], [1], [0], [0], [0, 0, 1, 0], [], []>} : vector<8x8xbf16>, vector<8x8xbf16>, vector<8x8xf32> -> vector<8x8xf32>
    %cst_7 = arith.constant dense<0xFF800000> : vector<8xf32>
    %15 = vector.multi_reduction <maximumf>, %14, %cst_7 [1] : vector<8x8xf32> to vector<8xf32>
    %16 = vector.shape_cast %15 : vector<8xf32> to vector<8x1xf32>
    %17 = vector.broadcast %16 : vector<8x1xf32> to vector<8x8xf32>
    %18 = arith.subf %14, %17 : vector<8x8xf32>
    %19 = math.exp %18 : vector<8x8xf32>
    %cst_8 = arith.constant dense<0.000000e+00> : vector<8xf32>
    %20 = vector.multi_reduction <add>, %19, %cst_8 [1] : vector<8x8xf32> to vector<8xf32>
    %21 = vector.shape_cast %20 : vector<8xf32> to vector<8x1xf32>
    %22 = tpu.reciprocal %21 {approx = true} : vector<8x1xf32> -> vector<8x1xf32>
    %23 = vector.broadcast %22 : vector<8x1xf32> to vector<8x8xf32>
    %24 = arith.mulf %19, %23 : vector<8x8xf32>
    %25 = arith.truncf %24 : vector<8x8xf32> to vector<8x8xbf16>
    %cst_9 = arith.constant dense<0.000000e+00> : vector<8x8xf32>
    %26 = tpu.matmul %25, %13, %cst_9 {dimension_numbers = #tpu.dot_dimension_numbers<[1], [0], [0], [1], [0, 0, 1, 1], [], []>} : vector<8x8xbf16>, vector<8x8xbf16>, vector<8x8xf32> -> vector<8x8xf32>
    %c0_10 = arith.constant 0 : index
    %c0_11 = arith.constant 0 : index
    %27 = vector.load %arg5[%c0_10, %c0_11] : memref<8x32xf32, #tpu.memory_space<vmem>>, vector<8x8xf32>
    tpu.vector_store %arg5[%c0_10, %c0_11], %26 {strides = array<i32>} : memref<8x32xf32, #tpu.memory_space<vmem>>, vector<8x8xf32>,
    %28 = vector.extract_strided_slice %7 {offsets = [0, 8], sizes = [8, 8], strides = [1, 1]} : vector<8x96xf32> to vector<8x8xf32>
    %29 = arith.truncf %28 : vector<8x8xf32> to vector<8x8xbf16>
    %30 = vector.extract_strided_slice %7 {offsets = [0, 40], sizes = [8, 8], strides = [1, 1]} : vector<8x96xf32> to vector<8x8xf32>
    %31 = arith.truncf %30 : vector<8x8xf32> to vector<8x8xbf16>
    %32 = vector.extract_strided_slice %7 {offsets = [0, 72], sizes = [8, 8], strides = [1, 1]} : vector<8x96xf32> to vector<8x8xf32>
    %33 = arith.truncf %32 : vector<8x8xf32> to vector<8x8xbf16>
    %cst_12 = arith.constant dense<0.000000e+00> : vector<8x8xf32>
    %34 = tpu.matmul %29, %31, %cst_12 {dimension_numbers = #tpu.dot_dimension_numbers<[1], [1], [0], [0], [0, 0, 1, 0], [], []>} : vector<8x8xbf16>, vector<8x8xbf16>, vector<8x8xf32> -> vector<8x8xf32>
    %cst_13 = arith.constant dense<0xFF800000> : vector<8xf32>
    %35 = vector.multi_reduction <maximumf>, %34, %cst_13 [1] : vector<8x8xf32> to vector<8xf32>
    %36 = vector.shape_cast %35 : vector<8xf32> to vector<8x1xf32>
    %37 = vector.broadcast %36 : vector<8x1xf32> to vector<8x8xf32>
    %38 = arith.subf %34, %37 : vector<8x8xf32>
    %39 = math.exp %38 : vector<8x8xf32>
    %cst_14 = arith.constant dense<0.000000e+00> : vector<8xf32>
    %40 = vector.multi_reduction <add>, %39, %cst_14 [1] : vector<8x8xf32> to vector<8xf32>
    %41 = vector.shape_cast %40 : vector<8xf32> to vector<8x1xf32>
    %42 = tpu.reciprocal %41 {approx = true} : vector<8x1xf32> -> vector<8x1xf32>
    %43 = vector.broadcast %42 : vector<8x1xf32> to vector<8x8xf32>
    %44 = arith.mulf %39, %43 : vector<8x8xf32>
    %45 = arith.truncf %44 : vector<8x8xf32> to vector<8x8xbf16>
    %cst_15 = arith.constant dense<0.000000e+00> : vector<8x8xf32>
    %46 = tpu.matmul %45, %33, %cst_15 {dimension_numbers = #tpu.dot_dimension_numbers<[1], [0], [0], [1], [0, 0, 1, 1], [], []>} : vector<8x8xbf16>, vector<8x8xbf16>, vector<8x8xf32> -> vector<8x8xf32>
    %c0_16 = arith.constant 0 : index
    %c8 = arith.constant 8 : index
    %47 = vector.load %arg5[%c0_16, %c8] : memref<8x32xf32, #tpu.memory_space<vmem>>, vector<8x8xf32>
    tpu.vector_store %arg5[%c0_16, %c8], %46 {strides = array<i32>} : memref<8x32xf32, #tpu.memory_space<vmem>>, vector<8x8xf32>,
    %48 = vector.extract_strided_slice %7 {offsets = [0, 16], sizes = [8, 8], strides = [1, 1]} : vector<8x96xf32> to vector<8x8xf32>
    %49 = arith.truncf %48 : vector<8x8xf32> to vector<8x8xbf16>
    %50 = vector.extract_strided_slice %7 {offsets = [0, 48], sizes = [8, 8], strides = [1, 1]} : vector<8x96xf32> to vector<8x8xf32>
    %51 = arith.truncf %50 : vector<8x8xf32> to vector<8x8xbf16>
    %52 = vector.extract_strided_slice %7 {offsets = [0, 80], sizes = [8, 8], strides = [1, 1]} : vector<8x96xf32> to vector<8x8xf32>
    %53 = arith.truncf %52 : vector<8x8xf32> to vector<8x8xbf16>
    %cst_17 = arith.constant dense<0.000000e+00> : vector<8x8xf32>
    %54 = tpu.matmul %49, %51, %cst_17 {dimension_numbers = #tpu.dot_dimension_numbers<[1], [1], [0], [0], [0, 0, 1, 0], [], []>} : vector<8x8xbf16>, vector<8x8xbf16>, vector<8x8xf32> -> vector<8x8xf32>
    %cst_18 = arith.constant dense<0xFF800000> : vector<8xf32>
    %55 = vector.multi_reduction <maximumf>, %54, %cst_18 [1] : vector<8x8xf32> to vector<8xf32>
    %56 = vector.shape_cast %55 : vector<8xf32> to vector<8x1xf32>
    %57 = vector.broadcast %56 : vector<8x1xf32> to vector<8x8xf32>
    %58 = arith.subf %54, %57 : vector<8x8xf32>
    %59 = math.exp %58 : vector<8x8xf32>
    %cst_19 = arith.constant dense<0.000000e+00> : vector<8xf32>
    %60 = vector.multi_reduction <add>, %59, %cst_19 [1] : vector<8x8xf32> to vector<8xf32>
    %61 = vector.shape_cast %60 : vector<8xf32> to vector<8x1xf32>
    %62 = tpu.reciprocal %61 {approx = true} : vector<8x1xf32> -> vector<8x1xf32>
    %63 = vector.broadcast %62 : vector<8x1xf32> to vector<8x8xf32>
    %64 = arith.mulf %59, %63 : vector<8x8xf32>
    %65 = arith.truncf %64 : vector<8x8xf32> to vector<8x8xbf16>
    %cst_20 = arith.constant dense<0.000000e+00> : vector<8x8xf32>
    %66 = tpu.matmul %65, %53, %cst_20 {dimension_numbers = #tpu.dot_dimension_numbers<[1], [0], [0], [1], [0, 0, 1, 1], [], []>} : vector<8x8xbf16>, vector<8x8xbf16>, vector<8x8xf32> -> vector<8x8xf32>
    %c0_21 = arith.constant 0 : index
    %c16 = arith.constant 16 : index
    %67 = vector.load %arg5[%c0_21, %c16] : memref<8x32xf32, #tpu.memory_space<vmem>>, vector<8x8xf32>
    tpu.vector_store %arg5[%c0_21, %c16], %66 {strides = array<i32>} : memref<8x32xf32, #tpu.memory_space<vmem>>, vector<8x8xf32>,
    %68 = vector.extract_strided_slice %7 {offsets = [0, 24], sizes = [8, 8], strides = [1, 1]} : vector<8x96xf32> to vector<8x8xf32>
    %69 = arith.truncf %68 : vector<8x8xf32> to vector<8x8xbf16>
    %70 = vector.extract_strided_slice %7 {offsets = [0, 56], sizes = [8, 8], strides = [1, 1]} : vector<8x96xf32> to vector<8x8xf32>
    %71 = arith.truncf %70 : vector<8x8xf32> to vector<8x8xbf16>
    %72 = vector.extract_strided_slice %7 {offsets = [0, 88], sizes = [8, 8], strides = [1, 1]} : vector<8x96xf32> to vector<8x8xf32>
    %73 = arith.truncf %72 : vector<8x8xf32> to vector<8x8xbf16>
    %cst_22 = arith.constant dense<0.000000e+00> : vector<8x8xf32>
    %74 = tpu.matmul %69, %71, %cst_22 {dimension_numbers = #tpu.dot_dimension_numbers<[1], [1], [0], [0], [0, 0, 1, 0], [], []>} : vector<8x8xbf16>, vector<8x8xbf16>, vector<8x8xf32> -> vector<8x8xf32>
    %cst_23 = arith.constant dense<0xFF800000> : vector<8xf32>
    %75 = vector.multi_reduction <maximumf>, %74, %cst_23 [1] : vector<8x8xf32> to vector<8xf32>
    %76 = vector.shape_cast %75 : vector<8xf32> to vector<8x1xf32>
    %77 = vector.broadcast %76 : vector<8x1xf32> to vector<8x8xf32>
    %78 = arith.subf %74, %77 : vector<8x8xf32>
    %79 = math.exp %78 : vector<8x8xf32>
    %cst_24 = arith.constant dense<0.000000e+00> : vector<8xf32>
    %80 = vector.multi_reduction <add>, %79, %cst_24 [1] : vector<8x8xf32> to vector<8xf32>
    %81 = vector.shape_cast %80 : vector<8xf32> to vector<8x1xf32>
    %82 = tpu.reciprocal %81 {approx = true} : vector<8x1xf32> -> vector<8x1xf32>
    %83 = vector.broadcast %82 : vector<8x1xf32> to vector<8x8xf32>
    %84 = arith.mulf %79, %83 : vector<8x8xf32>
    %85 = arith.truncf %84 : vector<8x8xf32> to vector<8x8xbf16>
    %cst_25 = arith.constant dense<0.000000e+00> : vector<8x8xf32>
    %86 = tpu.matmul %85, %73, %cst_25 {dimension_numbers = #tpu.dot_dimension_numbers<[1], [0], [0], [1], [0, 0, 1, 1], [], []>} : vector<8x8xbf16>, vector<8x8xbf16>, vector<8x8xf32> -> vector<8x8xf32>
    %c0_26 = arith.constant 0 : index
    %c24 = arith.constant 24 : index
    %87 = vector.load %arg5[%c0_26, %c24] : memref<8x32xf32, #tpu.memory_space<vmem>>, vector<8x8xf32>
    tpu.vector_store %arg5[%c0_26, %c24], %86 {strides = array<i32>} : memref<8x32xf32, #tpu.memory_space<vmem>>, vector<8x8xf32>,
    %c0_27 = arith.constant 0 : index
    %c0_28 = arith.constant 0 : index
    %88 = vector.load %arg5[%c0_27, %c0_28] : memref<8x32xf32, #tpu.memory_space<vmem>>, vector<8x32xf32>
    %c0_29 = arith.constant 0 : index
    %c0_30 = arith.constant 0 : index
    %c0_31 = arith.constant 0 : index
    %89 = vector.load %arg4[%c0_29, %c0_30, %c0_31] : memref<1x8x32xf32, #tpu.memory_space<vmem>>, vector<1x8x32xf32>
    %90 = vector.shape_cast %89 : vector<1x8x32xf32> to vector<8x32xf32>
    %91 = vector.shape_cast %88 : vector<8x32xf32> to vector<1x8x32xf32>
    tpu.vector_store %arg4[%c0_29, %c0_30, %c0_31], %91 {strides = array<i32>} : memref<1x8x32xf32, #tpu.memory_space<vmem>>, vector<1x8x32xf32>,
    return
  }
  func.func @transform_0(%arg0: i32) -> (i32, i32, i32) {
    %c0_i32 = arith.constant 0 : i32
    %c0_i32_0 = arith.constant 0 : i32
    %c0_i32_1 = arith.constant 0 : i32
    return %arg0, %c0_i32, %c0_i32_0 : i32, i32, i32
  }
  func.func @transform_1(%arg0: i32) -> (i32, i32) {
    %c0_i32 = arith.constant 0 : i32
    %c0_i32_0 = arith.constant 0 : i32
    %c0_i32_1 = arith.constant 0 : i32
    return %c0_i32, %c0_i32_0 : i32, i32
  }
  func.func @transform_2(%arg0: i32) -> (i32, i32) {
    %c0_i32 = arith.constant 0 : i32
    %c0_i32_0 = arith.constant 0 : i32
    %c0_i32_1 = arith.constant 0 : i32
    return %c0_i32, %c0_i32_0 : i32, i32
  }
  func.func @transform_3(%arg0: i32) -> (i32, i32, i32) {
    %c0_i32 = arith.constant 0 : i32
    %c0_i32_0 = arith.constant 0 : i32
    %c0_i32_1 = arith.constant 0 : i32
    return %arg0, %c0_i32, %c0_i32_0 : i32, i32, i32
  }
}

</mosaic_0001>

<llo_original>
// kernel: tpu_custom_call.1
$region0: #{tpu_custom_call.1}
  #allocation0 [shape = 'u32[]', space=smem, size = 0x4, offset = 0x4, fixed_abs, tag = 'smem constant byte address 0x4 - core index']
  #allocation1 [shape = 'u32[72,128]{1,0:T(1,128)}', space=vmem, size = 0x9000, scoped, tag = 'internal scratch']
  #allocation2 [shape = 'f32[8,32]{1,0:T(8,128)}', space=vmem, size = 0x1000, scoped, tag = 'scratch operand']
  %s0 = inlined_call_operand.hbm [shape: f32[2,8,32], index: 0, kind: input, shape index: {}]
  %s1 = inlined_call_operand.hbm [shape: bf16[32,96], index: 1, kind: input, shape index: {}]
  %s2 = inlined_call_operand.vmem [shape: f32[1,96], index: 2, kind: input, shape index: {}]
  %s3 = inlined_call_operand.hbm [shape: f32[2,8,32], index: 3, kind: output, shape index: {}]
  %s4 = sld [smem:[#allocation0]]
  $region53: #{tpu_custom_call.1} parent=0
    _
  %s6 = ssub.s32 1, %s4
  %s7 = scalar_select 0, %s6, %s4
  $region1: #{tpu_custom_call.1} parent=0
    #allocation3 [shape = 'u8[8192]{0}', space=vmem, size = 0x2000, scoped, tag = 'input window, operand 0']
    #allocation4 [shape = 's32[2]{0}', space=sflag, size = 0x8, scoped, tag = 'scoped memory for tpu_custom_call.1']
    #allocation5 [shape = 's32[2]{0}', space=sflag, size = 0x8, scoped, tag = 'scoped memory for tpu_custom_call.1']
    #allocation6 [shape = 'u8[8192]{0}', space=vmem, size = 0x2000, scoped, tag = 'input window, operand 1, single buffered']
    #allocation7 [shape = 's32[1]{0}', space=sflag, size = 0x4, scoped, tag = 'scoped memory for tpu_custom_call.1']
    #allocation8 [shape = 'u8[8192]{0}', space=vmem, size = 0x2000, scoped, tag = 'output window, operand 0']
    %8 = vsyncpa [#allocation4], 0
    %s9 = scalar_lea.sflag [#allocation4], 1
    %10 = vsyncpa %s9, 0
    %11 = vsyncpa [#allocation7], 0
    %12 = vsyncpa [#allocation5], 0
    %s13 = scalar_lea.sflag [#allocation5], 1
    %14 = vsyncpa %s13, 0
    loop: start=0, step=1, limit=4
    $region2: #{tpu_custom_call.1} parent=1 // loop_pre_header
      _
    $region3: #{tpu_custom_call.1} parent=1 // loop_header
      %s16 = sphi 0, %s20
      %p17 = scmp.ge.s32.totalorder %s16, 4
      %s26 = sphi 0, %s28
      %s29 = sphi 0, %s26
      %s30 = sphi 0, %s29
      %s46 = sphi 0, %s30
      %s50 = sphi 0, %s50
      %s52 = sphi 0, %s50
      %s53 = sphi 0, %s52
      %s67 = sphi 0, %s53
      %s71 = sphi 0, %s71
      %s73 = sphi 0, %s71
      %s74 = sphi 0, %s73
      %s88 = sphi 0, %s74
      %s94 = sphi 0, %s96
      %s97 = sphi 0, %s94
      %s98 = sphi 0, %s97
      %s114 = sphi 0, %s98
    $region4: #{tpu_custom_call.1} parent=1 // loop_header_branch
      %19 = sbr.rel (%p17) target = $region8
    $region5: #{tpu_custom_call.1} parent=1 // loop_body
      %s21 = ssub.s32 %s16, 1
      %s22 = ssub.s32 %s16, 2
      %s23 = sadd.s32 %s16, 1
      %s24 = ssub.s32 %s16, %s23
      %p25 = scmp.eq.s32.totalorder %s24, 0
      %s27 = sadd.s32 %s26, 1
      %s28 = scalar_select %p25, %s26, %s27
      %p31 = pneg %p25
      %p32 = scmp.eq.s32.totalorder %s16, 1
      %p33 = por %p31, %p32
      %p34 = scmp.ne.s32.totalorder %s26, %s29
      %p35 = scmp.eq.s32.totalorder %s16, 0
      %p36 = por %p34, %p35
      %p37 = scmp.ne.s32.totalorder %s26, %s29
      %p38 = scmp.eq.s32.totalorder %s21, 1
      %p39 = por %p37, %p38
      %p40 = scmp.ne.s32.totalorder %s29, %s30
      %p41 = scmp.eq.s32.totalorder %s21, 0
      %p42 = por %p40, %p41
      %p43 = scmp.ne.s32.totalorder %s29, %s30
      %p44 = scmp.eq.s32.totalorder %s22, 1
      %p45 = por %p43, %p44
      %p47 = scmp.ne.s32.totalorder %s30, %s46
      %p48 = scmp.eq.s32.totalorder %s22, 0
      %p49 = por %p47, %p48
      %s51 = sadd.s32 %s50, 1
      %p54 = scmp.eq.s32.totalorder %s16, 1
      %p55 = scmp.ne.s32.totalorder %s50, %s52
      %p56 = scmp.eq.s32.totalorder %s16, 0
      %p57 = por %p55, %p56
      %p58 = scmp.ne.s32.totalorder %s50, %s52
      %p59 = scmp.eq.s32.totalorder %s21, 1
      %p60 = por %p58, %p59
      %p61 = scmp.ne.s32.totalorder %s52, %s53
      %p62 = scmp.eq.s32.totalorder %s21, 0
      %p63 = por %p61, %p62
      %p64 = scmp.ne.s32.totalorder %s52, %s53
      %p65 = scmp.eq.s32.totalorder %s22, 1
      %p66 = por %p64, %p65
      %p68 = scmp.ne.s32.totalorder %s53, %s67
      %p69 = scmp.eq.s32.totalorder %s22, 0
      %p70 = por %p68, %p69
      %s72 = sadd.s32 %s71, 1
      %p75 = scmp.eq.s32.totalorder %s16, 1
      %p76 = scmp.ne.s32.totalorder %s71, %s73
      %p77 = scmp.eq.s32.totalorder %s16, 0
      %p78 = por %p76, %p77
      %p79 = scmp.ne.s32.totalorder %s71, %s73
      %p80 = scmp.eq.s32.totalorder %s21, 1
      %p81 = por %p79, %p80
      %p82 = scmp.ne.s32.totalorder %s73, %s74
      %p83 = scmp.eq.s32.totalorder %s21, 0
      %p84 = por %p82, %p83
      %p85 = scmp.ne.s32.totalorder %s73, %s74
      %p86 = scmp.eq.s32.totalorder %s22, 1
      %p87 = por %p85, %p86
      %p89 = scmp.ne.s32.totalorder %s74, %s88
      %p90 = scmp.eq.s32.totalorder %s22, 0
      %p91 = por %p89, %p90
      %s92 = ssub.s32 %s16, %s23
      %p93 = scmp.eq.s32.totalorder %s92, 0
      %s95 = sadd.s32 %s94, 1
      %s96 = scalar_select %p93, %s94, %s95
      %p99 = pneg %p93
      %p100 = scmp.eq.s32.totalorder %s16, 1
      %p101 = por %p99, %p100
      %p102 = scmp.ne.s32.totalorder %s94, %s97
      %p103 = scmp.eq.s32.totalorder %s16, 0
      %p104 = por %p102, %p103
      %p105 = scmp.ne.s32.totalorder %s94, %s97
      %p106 = scmp.eq.s32.totalorder %s21, 1
      %p107 = por %p105, %p106
      %p108 = scmp.ne.s32.totalorder %s97, %s98
      %p109 = scmp.eq.s32.totalorder %s21, 0
      %p110 = por %p108, %p109
      %p111 = scmp.ne.s32.totalorder %s97, %s98
      %p112 = scmp.eq.s32.totalorder %s22, 1
      %p113 = por %p111, %p112
      %p115 = scmp.ne.s32.totalorder %s98, %s114
      %p116 = scmp.eq.s32.totalorder %s22, 0
      %p117 = por %p115, %p116
      %p118 = scmp.le.s32.totalorder 1, %s16
      %p119 = scmp.lt.s32.totalorder %s16, 3
      %p120 = pnand %p118, %p119
      %p121 = pneg %p120
      // Predicated region
      $region9: #{tpu_custom_call.1} parent=5 // pred_check
        _
      $region10: #{tpu_custom_call.1} parent=5 // pred_check_branch
        %123 = sbr.rel (%p120) target = $region12
      $region11: #{tpu_custom_call.1} parent=5 // pred_region
        %s124 = ssub.s32 %s16, 1
        // Predicated region
        $region13: #{tpu_custom_call.1} parent=11 // pred_check
          %p125 = pneg %p63
        $region14: #{tpu_custom_call.1} parent=11 // pred_check_branch
          %127 = sbr.rel (%p125) target = $region16
        $region15: #{tpu_custom_call.1} parent=11 // pred_region
          %129 = vsyncadd [#allocation7], 0
          %s130 = sshll.u32 %s1, 4
          %s131 = int_to_ptr.hbm [resolvable:$true] %s130
          %s132 = sshll.u32 [#allocation6], 4
          %s133 = int_to_ptr.vmem [resolvable:$true] %s132
          %138 = dma.hbm_to_vmem [thread:$0]  %s131, 256, %s133, [#allocation7], 64, 64, 4
        $region16: #{tpu_custom_call.1} parent=11 // pred_fallthru
          _
        // Predicated region
        $region17: #{tpu_custom_call.1} parent=11 // pred_check
          %p139 = pneg %p84
        $region18: #{tpu_custom_call.1} parent=11 // pred_check_branch
          %141 = sbr.rel (%p139) target = $region20
        $region19: #{tpu_custom_call.1} parent=11 // pred_region
          _
        $region20: #{tpu_custom_call.1} parent=11 // pred_fallthru
          _
      $region12: #{tpu_custom_call.1} parent=5 // pred_fallthru
        _
      %p142 = scmp.lt.s32.totalorder %s16, 2
      // Predicated region
      $region21: #{tpu_custom_call.1} parent=5 // pred_check
        %p143 = pneg %p142
      $region22: #{tpu_custom_call.1} parent=5 // pred_check_branch
        %145 = sbr.rel (%p143) target = $region24
      $region23: #{tpu_custom_call.1} parent=5 // pred_region
        // Predicated region
        $region25: #{tpu_custom_call.1} parent=23 // pred_check
          %p146 = pneg %p36
        $region26: #{tpu_custom_call.1} parent=23 // pred_check_branch
          %148 = sbr.rel (%p146) target = $region28
        $region27: #{tpu_custom_call.1} parent=23 // pred_region
          %s149 = sand.u32 %s26, 1
          %s150 = scalar_lea.sflag [#allocation4], %s149
          %s151 = sand.u32 %s26, 1
          %s152 = smul.addr %s151, 8
          %s153 = scalar_lea.vmem [#allocation3], %s152
          %155 = vsyncadd %s150, 0
          %s156 = smul.addr %s16, 8
          %s157 = scalar_lea.hbm %s0, %s156
          %s159 = sshll.u32 %s157, 4
          %s160 = int_to_ptr.hbm [resolvable:$true] %s159
          %s161 = sshll.u32 %s153, 4
          %s162 = int_to_ptr.vmem [resolvable:$true] %s161
          %164 = dma.hbm_to_vmem [thread:$0]  %s160, 128, %s162, %s150
        $region28: #{tpu_custom_call.1} parent=23 // pred_fallthru
          _
      $region24: #{tpu_custom_call.1} parent=5 // pred_fallthru
        _
      %p165 = scmp.le.s32.totalorder 1, %s16
      %p166 = scmp.lt.s32.totalorder %s16, 3
      %p167 = pnand %p165, %p166
      %p168 = pneg %p167
      // Predicated region
      $region29: #{tpu_custom_call.1} parent=5 // pred_check
        _
      $region30: #{tpu_custom_call.1} parent=5 // pred_check_branch
        %170 = sbr.rel (%p167) target = $region32
      $region31: #{tpu_custom_call.1} parent=5 // pred_region
        %s171 = ssub.s32 %s16, 1
        %s172 = sand.u32 %s29, 1
        %s173 = scalar_lea.sflag [#allocation4], %s172
        %s174 = sand.u32 %s29, 1
        %s175 = smul.addr %s174, 8
        %s176 = scalar_lea.vmem [#allocation3], %s175
        // Predicated region
        $region33: #{tpu_custom_call.1} parent=31 // pred_check
          %p177 = pneg %p42
        $region34: #{tpu_custom_call.1} parent=31 // pred_check_branch
          %179 = sbr.rel (%p177) target = $region36
        $region35: #{tpu_custom_call.1} parent=31 // pred_region
          %181 = dma.done %s173, 128
        $region36: #{tpu_custom_call.1} parent=31 // pred_fallthru
          _
        // Predicated region
        $region37: #{tpu_custom_call.1} parent=31 // pred_check
          %p182 = pneg %p63
        $region38: #{tpu_custom_call.1} parent=31 // pred_check_branch
          %184 = sbr.rel (%p182) target = $region40
        $region39: #{tpu_custom_call.1} parent=31 // pred_region
          %186 = dma.done [#allocation7], 256
        $region40: #{tpu_custom_call.1} parent=31 // pred_fallthru
          _
        %s187 = sand.u32 %s29, 1
        %s188 = scalar_lea.sflag [#allocation4], %s187
        %s189 = sand.u32 %s29, 1
        %s190 = smul.addr %s189, 8
        %s191 = scalar_lea.vmem [#allocation3], %s190
        %p192 = pneg %p42
        %p193 = pneg %p39
        %p194 = pneg %p63
        %p195 = pneg %p60
        %p196 = pneg %p84
        %p197 = pneg %p81
        %p198 = pneg %p110
        %p199 = pneg %p107
        %s200 = sand.u32 %s97, 1
        %s201 = scalar_lea.sflag [#allocation5], %s200
        %s202 = sand.u32 %s97, 1
        %s203 = smul.addr %s202, 8
        %s204 = scalar_lea.vmem [#allocation8], %s203
        %v206 = vld [vmem:[%s176] sm:$0xff]
        %v207 = vpack.c.bf16 %v206, %v206
        %v208 = vld [vmem:[#allocation6] sm:$0xf]
        %v209 = vld [vmem:[#allocation6 + $0x4] sm:$0xf]
        %v210 = vld [vmem:[#allocation6 + $0x8] sm:$0xf]
        %v211 = vld [vmem:[#allocation6 + $0xc] sm:$0xf]
        %v212 = vld [vmem:[%s2] sm:$0x1]
        %v214 = vperm.slane %v212, 0
        %v220 = vunpack.c.l.b16 %v208
        %v221 = vunpack.c.l.b16 %v209
        %v222 = vunpack.c.l.b16 %v210
        %v223 = vunpack.c.l.b16 %v211
        %v224 = vpack.c.b16 %v221, %v220
        %v225 = vpack.c.b16 %v223, %v222
        %vm228 = vcmask 261120
        %v230 = vsel %vm228, %v207, 0
        %232 = vmatpush.bf16.msra.mxu0 0
        %233 = vmatpush.bf16.msra.mxu0 0
        %234 = vmatpush.bf16.msra.mxu0 0
        %235 = vmatpush.bf16.msra.mxu0 0
        %236 = vmatpush.bf16.msra.mxu0 0
        %237 = vmatpush.bf16.msra.mxu0 0
        %238 = vmatpush.bf16.msra.mxu0 %v225
        %239 = vmatpush.bf16.msra.mxu0 %v224
        %240 = vmatmul.bf16.gmra.mxu0 %v230
        %v241 = vpop.f32.mrf.mxu0
        %v242 = vadd.f32 %v214, %v241
        %v243 = vpop.f32.mrf.mxu0
        %244 = vdwg.mxu0
        %v245 = vpack.c.bf16 %v242, %v242
        %247 = vrot.lane.b32.xlu0 %v245, 96
        %v248 = vpop.permute.xlu0 %247
        %vm249 = vcmask 64512
        %v251 = vsel %vm249, %v245, 0
        %v254 = vsel %vm249, %v248, 0
        %256 = vmatpush.bf16.xpose.msra.mxu0 0
        %257 = vmatpush.bf16.xpose.msra.mxu0 0
        %258 = vmatpush.bf16.xpose.msra.mxu0 0
        %259 = vmatpush.bf16.xpose.msra.mxu0 0
        %260 = vmatpush.bf16.xpose.msra.mxu0 0
        %261 = vmatpush.bf16.xpose.msra.mxu0 0
        %262 = vmatpush.bf16.xpose.msra.mxu0 0
        %263 = vmatpush.bf16.xpose.msra.mxu0 %v254
        %264 = vmatmul.bf16.gmra.mxu0 %v251
        %v265 = vpop.f32.mrf.mxu0
        %v266 = vadd.f32 0.0, %v265
        %v267 = vpop.f32.mrf.mxu0
        %268 = vdwg.mxu0
        %v269 = vsel %vm249, %v266, -inf
        %270 = vmax.xlane.f32.xlu0 %v269
        %v271 = vpop.xlane.xlu0 %270
        %v272 = vsub.f32 %v266, %v271
        %v273 = vmul.f32 %v272, 1.442695
        %v274 = vpow.pop %v273
        %v275 = vsel %vm249, %v274, 0.0
        %276 = vadd.xlane.f32.xlu0 %v275
        %v277 = vpop.xlane.xlu0 %276
        %v278 = vrcp.pop %v277
        %v279 = vmul.f32 %v274, %v278
        %v280 = vpack.c.bf16 %v279, %v279
        %281 = vrot.lane.b32.xlu0 %v245, 64
        %v282 = vpop.permute.xlu0 %281
        %v284 = vsel %vm249, %v280, 0
        %vm286 = vcmask 1043456
        %v288 = vsel %vm286, %v282, 0
        %290 = vmatpush.bf16.msra.mxu0 0
        %291 = vmatpush.bf16.msra.mxu0 0
        %292 = vmatpush.bf16.msra.mxu0 0
        %293 = vmatpush.bf16.msra.mxu0 0
        %294 = vmatpush.bf16.msra.mxu0 0
        %295 = vmatpush.bf16.msra.mxu0 0
        %296 = vmatpush.bf16.msra.mxu0 0
        %297 = vmatpush.bf16.msra.mxu0 %v288
        %298 = vmatmul.bf16.gmra.mxu0 %v284
        %v299 = vpop.f32.mrf.mxu0
        %v300 = vadd.f32 0.0, %v299
        %v301 = vpop.f32.mrf.mxu0
        %302 = vdwg.mxu0
        %303 = vst.msk [vmem:[#allocation2] sm:$0xff] %vm249, %v300
        %304 = vrot.lane.b32.xlu0 %v245, 120
        %v305 = vpop.permute.xlu0 %304
        %306 = vrot.lane.b32.xlu0 %v245, 88
        %v307 = vpop.permute.xlu0 %306
        %v309 = vsel %vm249, %v305, 0
        %v312 = vsel %vm249, %v307, 0
        %314 = vmatpush.bf16.xpose.msra.mxu0 0
        %315 = vmatpush.bf16.xpose.msra.mxu0 0
        %316 = vmatpush.bf16.xpose.msra.mxu0 0
        %317 = vmatpush.bf16.xpose.msra.mxu0 0
        %318 = vmatpush.bf16.xpose.msra.mxu0 0
        %319 = vmatpush.bf16.xpose.msra.mxu0 0
        %320 = vmatpush.bf16.xpose.msra.mxu0 0
        %321 = vmatpush.bf16.xpose.msra.mxu0 %v312
        %322 = vmatmul.bf16.gmra.mxu0 %v309
        %v323 = vpop.f32.mrf.mxu0
        %v324 = vadd.f32 0.0, %v323
        %v325 = vpop.f32.mrf.mxu0
        %326 = vdwg.mxu0
        %v327 = vsel %vm249, %v324, -inf
        %328 = vmax.xlane.f32.xlu0 %v327
        %v329 = vpop.xlane.xlu0 %328
        %v330 = vsub.f32 %v324, %v329
        %v331 = vmul.f32 %v330, 1.442695
        %v332 = vpow.pop %v331
        %v333 = vsel %vm249, %v332, 0.0
        %334 = vadd.xlane.f32.xlu0 %v333
        %v335 = vpop.xlane.xlu0 %334
        %v336 = vrcp.pop %v335
        %v337 = vmul.f32 %v332, %v336
        %v338 = vpack.c.bf16 %v337, %v337
        %339 = vrot.lane.b32.xlu0 %v245, 56
        %v340 = vpop.permute.xlu0 %339
        %v342 = vsel %vm249, %v338, 0
        %v345 = vsel %vm286, %v340, 0
        %347 = vmatpush.bf16.msra.mxu0 0
        %348 = vmatpush.bf16.msra.mxu0 0
        %349 = vmatpush.bf16.msra.mxu0 0
        %350 = vmatpush.bf16.msra.mxu0 0
        %351 = vmatpush.bf16.msra.mxu0 0
        %352 = vmatpush.bf16.msra.mxu0 0
        %353 = vmatpush.bf16.msra.mxu0 0
        %354 = vmatpush.bf16.msra.mxu0 %v345
        %355 = vmatmul.bf16.gmra.mxu0 %v342
        %v356 = vpop.f32.mrf.mxu0
        %v357 = vadd.f32 0.0, %v356
        %v358 = vpop.f32.mrf.mxu0
        %359 = vdwg.mxu0
        %361 = vrot.lane.b32.xlu0 %v357, 8
        %v362 = vpop.permute.xlu0 %361
        %vm364 = vcmask 130112
        %365 = vst.msk [vmem:[#allocation2] sm:$0xff] %vm364, %v362
        %366 = vrot.lane.b32.xlu0 %v245, 112
        %v367 = vpop.permute.xlu0 %366
        %368 = vrot.lane.b32.xlu0 %v245, 80
        %v369 = vpop.permute.xlu0 %368
        %v371 = vsel %vm249, %v367, 0
        %v374 = vsel %vm249, %v369, 0
        %376 = vmatpush.bf16.xpose.msra.mxu0 0
        %377 = vmatpush.bf16.xpose.msra.mxu0 0
        %378 = vmatpush.bf16.xpose.msra.mxu0 0
        %379 = vmatpush.bf16.xpose.msra.mxu0 0
        %380 = vmatpush.bf16.xpose.msra.mxu0 0
        %381 = vmatpush.bf16.xpose.msra.mxu0 0
        %382 = vmatpush.bf16.xpose.msra.mxu0 0
        %383 = vmatpush.bf16.xpose.msra.mxu0 %v374
        %384 = vmatmul.bf16.gmra.mxu0 %v371
        %v385 = vpop.f32.mrf.mxu0
        %v386 = vadd.f32 0.0, %v385
        %v387 = vpop.f32.mrf.mxu0
        %388 = vdwg.mxu0
        %v389 = vsel %vm249, %v386, -inf
        %390 = vmax.xlane.f32.xlu0 %v389
        %v391 = vpop.xlane.xlu0 %390
        %v392 = vsub.f32 %v386, %v391
        %v393 = vmul.f32 %v392, 1.442695
        %v394 = vpow.pop %v393
        %v395 = vsel %vm249, %v394, 0.0
        %396 = vadd.xlane.f32.xlu0 %v395
        %v397 = vpop.xlane.xlu0 %396
        %v398 = vrcp.pop %v397
        %v399 = vmul.f32 %v394, %v398
        %v400 = vpack.c.bf16 %v399, %v399
        %401 = vrot.lane.b32.xlu0 %v245, 48
        %v402 = vpop.permute.xlu0 %401
        %v404 = vsel %vm249, %v400, 0
        %v407 = vsel %vm286, %v402, 0
        %409 = vmatpush.bf16.msra.mxu0 0
        %410 = vmatpush.bf16.msra.mxu0 0
        %411 = vmatpush.bf16.msra.mxu0 0
        %412 = vmatpush.bf16.msra.mxu0 0
        %413 = vmatpush.bf16.msra.mxu0 0
        %414 = vmatpush.bf16.msra.mxu0 0
        %415 = vmatpush.bf16.msra.mxu0 0
        %416 = vmatpush.bf16.msra.mxu0 %v407
        %417 = vmatmul.bf16.gmra.mxu0 %v404
        %v418 = vpop.f32.mrf.mxu0
        %v419 = vadd.f32 0.0, %v418
        %v420 = vpop.f32.mrf.mxu0
        %421 = vdwg.mxu0
        %423 = vrot.lane.b32.xlu0 %v419, 16
        %v424 = vpop.permute.xlu0 %423
        %vm426 = vcmask 195712
        %427 = vst.msk [vmem:[#allocation2] sm:$0xff] %vm426, %v424
        %428 = vrot.lane.b32.xlu0 %v245, 104
        %v429 = vpop.permute.xlu0 %428
        %430 = vrot.lane.b32.xlu0 %v245, 72
        %v431 = vpop.permute.xlu0 %430
        %v433 = vsel %vm249, %v429, 0
        %v436 = vsel %vm249, %v431, 0
        %438 = vmatpush.bf16.xpose.msra.mxu0 0
        %439 = vmatpush.bf16.xpose.msra.mxu0 0
        %440 = vmatpush.bf16.xpose.msra.mxu0 0
        %441 = vmatpush.bf16.xpose.msra.mxu0 0
        %442 = vmatpush.bf16.xpose.msra.mxu0 0
        %443 = vmatpush.bf16.xpose.msra.mxu0 0
        %444 = vmatpush.bf16.xpose.msra.mxu0 0
        %445 = vmatpush.bf16.xpose.msra.mxu0 %v436
        %446 = vmatmul.bf16.gmra.mxu0 %v433
        %v447 = vpop.f32.mrf.mxu0
        %v448 = vadd.f32 0.0, %v447
        %v449 = vpop.f32.mrf.mxu0
        %450 = vdwg.mxu0
        %v451 = vsel %vm249, %v448, -inf
        %452 = vmax.xlane.f32.xlu0 %v451
        %v453 = vpop.xlane.xlu0 %452
        %v454 = vsub.f32 %v448, %v453
        %v455 = vmul.f32 %v454, 1.442695
        %v456 = vpow.pop %v455
        %v457 = vsel %vm249, %v456, 0.0
        %458 = vadd.xlane.f32.xlu0 %v457
        %v459 = vpop.xlane.xlu0 %458
        %v460 = vrcp.pop %v459
        %v461 = vmul.f32 %v456, %v460
        %v462 = vpack.c.bf16 %v461, %v461
        %463 = vrot.lane.b32.xlu0 %v245, 40
        %v464 = vpop.permute.xlu0 %463
        %v466 = vsel %vm249, %v462, 0
        %v469 = vsel %vm286, %v464, 0
        %471 = vmatpush.bf16.msra.mxu0 0
        %472 = vmatpush.bf16.msra.mxu0 0
        %473 = vmatpush.bf16.msra.mxu0 0
        %474 = vmatpush.bf16.msra.mxu0 0
        %475 = vmatpush.bf16.msra.mxu0 0
        %476 = vmatpush.bf16.msra.mxu0 0
        %477 = vmatpush.bf16.msra.mxu0 0
        %478 = vmatpush.bf16.msra.mxu0 %v469
        %479 = vmatmul.bf16.gmra.mxu0 %v466
        %v480 = vpop.f32.mrf.mxu0
        %v481 = vadd.f32 0.0, %v480
        %v482 = vpop.f32.mrf.mxu0
        %483 = vdwg.mxu0
        %485 = vrot.lane.b32.xlu0 %v481, 24
        %v486 = vpop.permute.xlu0 %485
        %vm488 = vcmask 261312
        %489 = vst.msk [vmem:[#allocation2] sm:$0xff] %vm488, %v486
        %v490 = vld [vmem:[#allocation2] sm:$0xff]
        %491 = vst.msk [vmem:[%s204] sm:$0xff] %vm228, %v490
        %s492 = sand.u32 %s97, 1
        %s493 = scalar_lea.sflag [#allocation5], %s492
        %s494 = sand.u32 %s97, 1
        %s495 = smul.addr %s494, 8
        %s496 = scalar_lea.vmem [#allocation8], %s495
        // Predicated region
        $region41: #{tpu_custom_call.1} parent=31 // pred_check
          %p497 = pneg %p107
        $region42: #{tpu_custom_call.1} parent=31 // pred_check_branch
          %499 = sbr.rel (%p497) target = $region44
        $region43: #{tpu_custom_call.1} parent=31 // pred_region
          %501 = vsyncadd %s493, 0
          %s502 = smul.addr %s21, 8
          %s503 = scalar_lea.hbm %s3, %s502
          %s505 = sshll.u32 %s496, 4
          %s506 = int_to_ptr.vmem [resolvable:$true] %s505
          %s507 = sshll.u32 %s503, 4
          %s508 = int_to_ptr.hbm [resolvable:$true] %s507
          %510 = dma.vmem_to_hbm [thread:$0]  %s506, 128, %s508, %s493
        $region44: #{tpu_custom_call.1} parent=31 // pred_fallthru
          _
      $region32: #{tpu_custom_call.1} parent=5 // pred_fallthru
        _
      %p511 = scmp.le.s32.totalorder 2, %s16
      // Predicated region
      $region45: #{tpu_custom_call.1} parent=5 // pred_check
        %p512 = pneg %p511
      $region46: #{tpu_custom_call.1} parent=5 // pred_check_branch
        %514 = sbr.rel (%p512) target = $region48
      $region47: #{tpu_custom_call.1} parent=5 // pred_region
        %s515 = ssub.s32 %s16, 2
        // Predicated region
        $region49: #{tpu_custom_call.1} parent=47 // pred_check
          %p516 = pneg %p113
        $region50: #{tpu_custom_call.1} parent=47 // pred_check_branch
          %518 = sbr.rel (%p516) target = $region52
        $region51: #{tpu_custom_call.1} parent=47 // pred_region
          %s519 = sand.u32 %s98, 1
          %s520 = scalar_lea.sflag [#allocation5], %s519
          %s521 = sand.u32 %s98, 1
          %s522 = smul.addr %s521, 8
          %s523 = scalar_lea.vmem [#allocation8], %s522
          %525 = dma.done %s520, 128
        $region52: #{tpu_custom_call.1} parent=47 // pred_fallthru
          _
      $region48: #{tpu_custom_call.1} parent=5 // pred_fallthru
        _
    $region6: #{tpu_custom_call.1} parent=1 // loop_footer
      %s20 = sadd.s32 1, %s16
    $region7: #{tpu_custom_call.1} parent=1 // loop_footer_branch
      %15 = sbr.rel target = $region3
    $region8: #{tpu_custom_call.1} parent=1 // loop_exit
      _
    %526 = vsyncpa [#allocation4], 1
    %s527 = scalar_lea.sflag [#allocation4], 1
    %528 = vsyncpa %s527, 1
    %529 = vsyncpa [#allocation7], 1
    %530 = vsyncpa [#allocation5], 1
    %s531 = scalar_lea.sflag [#allocation5], 1
    %532 = vsyncpa %s531, 1

</llo_original>
